<compile_context>
chip_gen: v5e
topology: v5e:2x2
jax: 0.10.0
libtpu: 0.0.40
codegen_flags: <defaults>
</compile_context>

<pallas_src>
import functools
import math

import jax
import jax.numpy as jnp
from jax.experimental import pallas as pl
from jax.experimental.pallas import tpu as pltpu

EPS = 1e-5


# --------------------------------------------------------------------------- kernels
def _conv1_kernel(*refs, inkernel_taps):
    """Fused conv1 (+ optional 1x1 skip-conv rows) on one column tile, plus one
    consolidated per-tile statistics output [1, rows, 2] = (sum, sum_sq)."""
    if inkernel_taps:
        x_ref, mf_ref, ml_ref, w_ref, b_ref, y_ref, st_ref = refs
        x = x_ref[...]                                                  # [Cin, T]
        t = x.shape[1]
        left = pltpu.roll(x, shift=1, axis=1) * mf_ref[...]             # x[:, j-1]
        right = pltpu.roll(x, shift=t - 1, axis=1) * ml_ref[...]        # x[:, j+1]
        p = jnp.concatenate([left, x, right], axis=0)                   # [3*Cin, T]
    else:
        p_ref, w_ref, b_ref, y_ref, st_ref = refs
        p = p_ref[...]                                                  # [3*Cin, T]

    y = jnp.dot(w_ref[...], p,
                preferred_element_type=jnp.float32) + b_ref[...]        # [R, T]
    y_ref[...] = y
    s = jnp.sum(y, axis=1, keepdims=True)                               # [R, 1]
    q = jnp.sum(y * y, axis=1, keepdims=True)                           # [R, 1]
    st_ref[...] = jnp.concatenate([s, q], axis=1)[None]                 # [1, R, 2]


def _conv2_kernel(h_ref, a1_ref, c1_ref, mf_ref, ml_ref, w2_ref, b2_ref,
                  y2_ref, st_ref, *, cout):
    """BN1 affine + ReLU + conv2 (k=3, stride 1, pad 1) + consolidated BN2 stats."""
    h = jnp.maximum(h_ref[...][:cout] * a1_ref[...] + c1_ref[...], 0.0)  # [Cout, T]
    t = h.shape[1]
    # conv2 taps: column j needs h[:, j-1] / h[:, j+1] within the same sample.
    # Tiles hold whole samples, so a lane roll + boundary mask is exact (padding=1).
    left = pltpu.roll(h, shift=1, axis=1) * mf_ref[...]                  # h[:, j-1]
    right = pltpu.roll(h, shift=t - 1, axis=1) * ml_ref[...]             # h[:, j+1]
    p2 = jnp.concatenate([left, h, right], axis=0)                       # [3*Cout, T]

    y2 = jnp.dot(w2_ref[...], p2,
                 preferred_element_type=jnp.float32) + b2_ref[...]       # [Cout, T]
    y2_ref[...] = y2
    s = jnp.sum(y2, axis=1, keepdims=True)
    q = jnp.sum(y2 * y2, axis=1, keepdims=True)
    st_ref[...] = jnp.concatenate([s, q], axis=1)[None]


def _finalize_kernel(*refs, projection, cout):
    """BN2 affine + (skip BN affine | identity) + residual add + ReLU."""
    if projection:
        y2_ref, sk_ref, a2_ref, c2_ref, as_ref, cs_ref, out_ref = refs
        skip = sk_ref[...][-cout:] * as_ref[...] + cs_ref[...]
    else:
        y2_ref, x_ref, a2_ref, c2_ref, out_ref = refs
        skip = x_ref[...]
    out_ref[...] = jnp.maximum(y2_ref[...] * a2_ref[...] + c2_ref[...] + skip, 0.0)


# ------------------------------------------------------------------------------ glue
def _fold_bn(s, q, gamma, beta, count):
    """Training-mode BN folded to per-channel affine (one-pass E[y^2]-mu^2 variance)."""
    mu = s / count
    var = q / count - mu * mu
    a = jnp.asarray(gamma, jnp.float32).reshape(-1, 1) * jax.lax.rsqrt(var + EPS)
    c = jnp.asarray(beta, jnp.float32).reshape(-1, 1) - mu * a
    return a, c


def _choose_tile_samples(n, lout, max_cols=8192):
    """Largest whole-sample, lane-dense tile while preferring >= 2 (even) grid steps."""
    best = None
    for cand in range(1, n + 1):
        if n % cand:
            continue
        cols = cand * lout
        if cols % 128 or cols > max_cols:
            continue
        g = n // cand
        key = (g >= 2, g % 2 == 0, cols)
        if best is None or key > best[0]:
            best = (key, cand)
    # TODO(synk): pad m to a 128 multiple instead of this single-tile fallback.
    return best[1] if best else n


def resblock_forward(x_ncl, params, stride, *, tile_samples=None):
    n, cin, l = x_ncl.shape
    cout = params['w1'].shape[0]
    projection = (cout != cin)
    if not projection and stride != 1:
        # PyTorch's identity skip would also fail (shape mismatch) in this case.
        raise ValueError("identity skip requires stride == 1")

    lout = (l + 2 - 3) // stride + 1
    m = n * lout
    f32 = jnp.float32
    x = x_ncl.astype(f32)
    colv = lambda v: jnp.asarray(v, f32).reshape(-1, 1)

    # ---- weights in channels-first matmul layout (column = tap*Cin + c); the 1x1
    #      skip conv is FUSED into the conv1 matmul as extra rows that only touch the
    #      centre-tap columns (the centre tap at stride s IS the 1x1-conv input).
    w1m = jnp.transpose(params['w1'], (0, 2, 1)).reshape(cout, 3 * cin)
    w2m = jnp.transpose(params['w2'], (0, 2, 1)).reshape(cout, 3 * cout)
    if projection:
        z = jnp.zeros((cout, cin), f32)
        wsm = params['ws'][:, :, 0].astype(f32)
        w_stack = jnp.concatenate(
            [w1m, jnp.concatenate([z, wsm, z], axis=1)], axis=0)        # [2*Cout, 3*Cin]
        b_stack = jnp.concatenate([colv(params['b1']), colv(params['bs'])], axis=0)
    else:
        w_stack, b_stack = w1m, colv(params['b1'])
    rows1 = w_stack.shape[0]

    # ---- stage-1 input: channels-first x (taps built in-kernel) for stride==1,
    #      wrapper im2col only for stride>1.
    # TODO(synk): build the strided taps in-kernel for stride>1 too and drop this slab.
    inkernel_taps = (stride == 1)
    x_cf = None
    if inkernel_taps:
        x_cf = jnp.transpose(x, (1, 0, 2)).reshape(cin, m)              # [Cin, m]
        stage1_in, in1_rows = x_cf, cin
    else:
        xp = jnp.pad(x, ((0, 0), (0, 0), (1, 1)))
        span = stride * (lout - 1) + 1
        p1 = jnp.stack([xp[:, :, k:k + span:stride] for k in range(3)], axis=0)
        stage1_in = jnp.transpose(p1, (0, 2, 1, 3)).reshape(3 * cin, m)  # [3*Cin, m]
        in1_rows = 3 * cin

    # ---- tiling: whole samples per tile so conv taps never cross a tile boundary.
    sp = tile_samples if tile_samples is not None else _choose_tile_samples(n, lout)
    if n % sp != 0 or (sp < n and (sp * lout) % 128 != 0):
        sp = n                                    # single tile: block == full array
    tcols = sp * lout
    ngrid = n // sp
    grid = (ngrid,)

    big = lambda rows: pl.BlockSpec((rows, tcols), lambda i: (0, i))
    small = lambda a: pl.BlockSpec(a.shape, lambda i: (0, 0))

    # per-tile boundary masks (identical for every tile: tiles hold whole samples)
    pos = jnp.arange(tcols, dtype=jnp.int32) % lout
    mask_nf = (pos != 0).astype(f32).reshape(1, tcols)                  # left tap valid
    mask_nl = (pos != lout - 1).astype(f32).reshape(1, tcols)           # right tap valid

    def cparams(block_shapes):
        per_step = sum(4 * math.prod(s) for s in block_shapes)
        limit = int(min(max(4 * per_step + (4 << 20), 16 << 20), 48 << 20))
        return pltpu.CompilerParams(dimension_semantics=("parallel",),
                                    vmem_limit_bytes=limit)

    nbytes = lambda objs: int(sum(4 * math.prod(o.shape) for o in objs))

    # -------- stage 1: conv1 (+ fused skip conv) + consolidated partial stats -------
    st_shape1 = jax.ShapeDtypeStruct((ngrid, rows1, 2), f32)
    st_spec1 = pl.BlockSpec((1, rows1, 2), lambda i: (i, 0, 0))
    y1_shape = jax.ShapeDtypeStruct((rows1, m), f32)

    if inkernel_taps:
        ins1 = (stage1_in, mask_nf, mask_nl, w_stack, b_stack)
        in_specs1 = [big(in1_rows), small(mask_nf), small(mask_nl),
                     small(w_stack), small(b_stack)]
    else:
        ins1 = (stage1_in, w_stack, b_stack)
        in_specs1 = [big(in1_rows), small(w_stack), small(b_stack)]
    blocks1 = [(in1_rows, tcols), (rows1, tcols), (1, rows1, 2)]
    flops1 = 2 * m * rows1 * 3 * cin

    y1, st1 = pl.pallas_call(
        functools.partial(_conv1_kernel, inkernel_taps=inkernel_taps),
        grid=grid, in_specs=in_specs1,
        out_specs=(big(rows1), st_spec1), out_shape=(y1_shape, st_shape1),
        compiler_params=cparams(blocks1),
        cost_estimate=pl.CostEstimate(flops=flops1, transcendentals=0,
                                      bytes_accessed=nbytes(list(ins1) + [y1_shape, st_shape1])),
    )(*ins1)

    sums1 = st1.sum(axis=0)                                             # [rows1, 2]
    a1, c1 = _fold_bn(sums1[:cout, 0:1], sums1[:cout, 1:2],
                      params['g1'], params['be1'], m)

    # -------- stage 2: BN1 + ReLU + conv2 + consolidated BN2 partial stats ----------
    h_rows = cout if (not projection or cout % 8 == 0) else rows1
    ins2 = (y1, a1, c1, mask_nf, mask_nl, w2m, colv(params['b2']))
    in_specs2 = ([pl.BlockSpec((h_rows, tcols), lambda i: (0, i))]
                 + [small(a) for a in ins2[1:]])
    st_shape2 = jax.ShapeDtypeStruct((ngrid, cout, 2), f32)
    st_spec2 = pl.BlockSpec((1, cout, 2), lambda i: (i, 0, 0))
    y2_shape = jax.ShapeDtypeStruct((cout, m), f32)
    blocks2 = [(h_rows, tcols), (cout, tcols), (1, cout, 2)]
    flops2 = 2 * m * cout * 3 * cout + 6 * m * cout

    y2, st2 = pl.pallas_call(
        functools.partial(_conv2_kernel, cout=cout),
        grid=grid, in_specs=in_specs2,
        out_specs=(big(cout), st_spec2), out_shape=(y2_shape, st_shape2),
        compiler_params=cparams(blocks2),
        cost_estimate=pl.CostEstimate(flops=flops2, transcendentals=0,
                                      bytes_accessed=nbytes(list(ins2) + [y2_shape, st_shape2])),
    )(*ins2)

    sums2 = st2.sum(axis=0)
    a2, c2 = _fold_bn(sums2[:, 0:1], sums2[:, 1:2], params['g2'], params['be2'], m)

    # -------- stage 3: BN2 + skip BN / identity + residual add + ReLU ---------------
    if projection:
        a_s, c_s = _fold_bn(sums1[cout:, 0:1], sums1[cout:, 1:2],
                            params['gs'], params['bes'], m)
        skip_rows = cout if cout % 8 == 0 else rows1
        skip_blk = 1 if skip_rows == cout else 0
        skip_spec = pl.BlockSpec((skip_rows, tcols), lambda i: (skip_blk, i))
        ins3 = (y2, y1, a2, c2, a_s, c_s)
        in_specs3 = [big(cout), skip_spec] + [small(a) for a in ins3[2:]]
    else:
        ins3 = (y2, x_cf, a2, c2)
        in_specs3 = [big(cout), big(cout)] + [small(a) for a in ins3[2:]]
    out_shape = jax.ShapeDtypeStruct((cout, m), f32)
    blocks3 = [(cout, tcols)] * 3

    out_cf = pl.pallas_call(
        functools.partial(_finalize_kernel, projection=projection, cout=cout),
        grid=grid, in_specs=in_specs3, out_specs=big(cout), out_shape=out_shape,
        compiler_params=cparams(blocks3),
        cost_estimate=pl.CostEstimate(flops=8 * m * cout, transcendentals=0,
                                      bytes_accessed=nbytes(list(ins3) + [out_shape])),
    )(*ins3)

    # TODO(synk): write (N, Cout, Lout) directly from the finalize kernel to drop this
    # wrapper transpose (one extra HBM pass).
    return jnp.transpose(out_cf.reshape(cout, n, lout), (1, 0, 2))      # back to NCL


# ------------------------------------------------------------------------- reference
def resblock_reference(x_ncl, params, stride):
    def conv1d(x, w, b, s, pad):
        y = jax.lax.conv_general_dilated(
            x, w, window_strides=(s,), padding=[(pad, pad)],
            dimension_numbers=('NCH', 'OIH', 'NCH'),
            precision=jax.lax.Precision.HIGHEST)
        return y + b[None, :, None]

    def bn(x, g, be):
        mu = x.mean(axis=(0, 2), keepdims=True)
        var = ((x - mu) ** 2).mean(axis=(0, 2), keepdims=True)
        return (x - mu) * jax.lax.rsqrt(var + EPS) * g[None, :, None] + be[None, :, None]

    h = conv1d(x_ncl, params['w1'], params['b1'], stride, 1)
    h = jnp.maximum(bn(h, params['g1'], params['be1']), 0.0)
    h = conv1d(h, params['w2'], params['b2'], 1, 1)
    h = bn(h, params['g2'], params['be2'])
    cout, cin = params['w1'].shape[0], params['w1'].shape[1]
    if cout != cin:
        s = conv1d(x_ncl, params['ws'], params['bs'], stride, 0)
        s = bn(s, params['gs'], params['bes'])
    else:
        s = x_ncl
    return jnp.maximum(s + h, 0.0)


# ----------------------------------------------------------------------------- params
def init_resblock_params(key, cin, cout):
    ks = jax.random.split(key, 12)
    f = jnp.float32
    return dict(
        w1=0.3 * jax.random.normal(ks[0], (cout, cin, 3), f),
        b1=0.1 * jax.random.normal(ks[1], (cout,), f),
        g1=1.0 + 0.1 * jax.random.normal(ks[2], (cout,), f),
        be1=0.1 * jax.random.normal(ks[3], (cout,), f),
        w2=0.3 * jax.random.normal(ks[4], (cout, cout, 3), f),
        b2=0.1 * jax.random.normal(ks[5], (cout,), f),
        g2=1.0 + 0.1 * jax.random.normal(ks[6], (cout,), f),
        be2=0.1 * jax.random.normal(ks[7], (cout,), f),
        ws=0.3 * jax.random.normal(ks[8], (cout, cin, 1), f),
        bs=0.1 * jax.random.normal(ks[9], (cout,), f),
        gs=1.0 + 0.1 * jax.random.normal(ks[10], (cout,), f),
        bes=0.1 * jax.random.normal(ks[11], (cout,), f),
    )


if __name__ == "__main__":
    key = jax.random.PRNGKey(0)
    kx1, kp1, kx2, kp2 = jax.random.split(key, 4)

    # --- projection block: ResBlock(4, 8, stride=2), grid of 2 lane-dense tiles ---
    N, CIN, COUT, L, STRIDE = 4, 4, 8, 128, 2
    x = jax.random.normal(kx1, (N, CIN, L), jnp.float32)
    params = init_resblock_params(kp1, CIN, COUT)
    out = jax.block_until_ready(resblock_forward(x, params, STRIDE, tile_samples=2))
    ref = jax.block_until_ready(resblock_reference(x, params, STRIDE))
    lout = (L + 2 - 3) // STRIDE + 1
    assert out.shape == (N, COUT, lout), out.shape
    assert bool(jnp.all(jnp.isfinite(out)))
    assert bool(jnp.allclose(out, ref, rtol=2e-3, atol=2e-3)), \
        float(jnp.max(jnp.abs(out - ref)))

    # --- identity-skip block: ResBlock(8, 8, stride=1), grid of 2 tiles,
    #     in-kernel conv1 taps (no im2col slab) ---
    N2, C2, L2 = 2, 8, 128
    x2 = jax.random.normal(kx2, (N2, C2, L2), jnp.float32)
    params2 = init_resblock_params(kp2, C2, C2)
    out2 = jax.block_until_ready(resblock_forward(x2, params2, 1, tile_samples=1))
    ref2 = jax.block_until_ready(resblock_reference(x2, params2, 1))
    assert out2.shape == (N2, C2, L2), out2.shape
    assert bool(jnp.all(jnp.isfinite(out2)))
    assert bool(jnp.allclose(out2, ref2, rtol=2e-3, atol=2e-3)), \
        float(jnp.max(jnp.abs(out2 - ref2)))

    print("KERNEL_OK")
</pallas_src>

<mosaic_0001>
module attributes {stable_mosaic.version = 11 : i64} {
  func.func @_conv1_kernel(%arg0: i32, %arg1: memref<12x128xf32, #tpu.memory_space<vmem>>, %arg2: memref<16x12xf32, #tpu.memory_space<vmem>>, %arg3: memref<16x1xf32, #tpu.memory_space<vmem>>, %arg4: memref<16x128xf32, #tpu.memory_space<vmem>>, %arg5: memref<1x16x2xf32, #tpu.memory_space<vmem>>) attributes {dimension_semantics = [#tpu.dimension_semantics<parallel>], iteration_bounds = array<i64: 2>, scalar_prefetch = 0 : i64, scratch_operands = 0 : i64, tpu.core_type = #tpu.core_type<tc>, window_params = [{transform_indices = @transform_0, window_bounds = array<i64: 12, 128>}, {pipeline_mode = #tpu.pipeline_mode<synchronous>, transform_indices = @transform_1, window_bounds = array<i64: 16, 12>}, {pipeline_mode = #tpu.pipeline_mode<synchronous>, transform_indices = @transform_2, window_bounds = array<i64: 16, 1>}, {transform_indices = @transform_3, window_bounds = array<i64: 16, 128>}, {transform_indices = @transform_4, window_bounds = array<i64: 1, 16, 2>}]} {
    %c0 = arith.constant 0 : index
    %c0_0 = arith.constant 0 : index
    %0 = vector.load %arg1[%c0, %c0_0] : memref<12x128xf32, #tpu.memory_space<vmem>>, vector<12x128xf32>
    %c0_1 = arith.constant 0 : index
    %c0_2 = arith.constant 0 : index
    %1 = vector.load %arg2[%c0_1, %c0_2] : memref<16x12xf32, #tpu.memory_space<vmem>>, vector<16x12xf32>
    %cst = arith.constant dense<0.000000e+00> : vector<16x128xf32>
    %2 = tpu.matmul %1, %0, %cst {dimension_numbers = #tpu.dot_dimension_numbers<[1], [0], [0], [1], [0, 0, 1, 1], [], []>} : vector<16x12xf32>, vector<12x128xf32>, vector<16x128xf32> -> vector<16x128xf32>
    %c0_3 = arith.constant 0 : index
    %c0_4 = arith.constant 0 : index
    %3 = vector.load %arg3[%c0_3, %c0_4] : memref<16x1xf32, #tpu.memory_space<vmem>>, vector<16x1xf32>
    %4 = vector.broadcast %3 : vector<16x1xf32> to vector<16x128xf32>
    %5 = arith.addf %2, %4 : vector<16x128xf32>
    %c0_5 = arith.constant 0 : index
    %c0_6 = arith.constant 0 : index
    %6 = vector.load %arg4[%c0_5, %c0_6] : memref<16x128xf32, #tpu.memory_space<vmem>>, vector<16x128xf32>
    tpu.vector_store %arg4[%c0_5, %c0_6], %5 {strides = array<i32>} : memref<16x128xf32, #tpu.memory_space<vmem>>, vector<16x128xf32>,
    %cst_7 = arith.constant dense<0.000000e+00> : vector<16xf32>
    %7 = vector.multi_reduction <add>, %5, %cst_7 [1] : vector<16x128xf32> to vector<16xf32>
    %8 = vector.shape_cast %7 : vector<16xf32> to vector<16x1xf32>
    %9 = arith.mulf %5, %5 : vector<16x128xf32>
    %cst_8 = arith.constant dense<0.000000e+00> : vector<16xf32>
    %10 = vector.multi_reduction <add>, %9, %cst_8 [1] : vector<16x128xf32> to vector<16xf32>
    %11 = vector.shape_cast %10 : vector<16xf32> to vector<16x1xf32>
    %12 = tpu.concatenate %8, %11 in 1 : vector<16x1xf32>, vector<16x1xf32> -> vector<16x2xf32>
    %13 = vector.shape_cast %12 : vector<16x2xf32> to vector<1x16x2xf32>
    %c0_9 = arith.constant 0 : index
    %c0_10 = arith.constant 0 : index
    %c0_11 = arith.constant 0 : index
    %14 = vector.load %arg5[%c0_9, %c0_10, %c0_11] : memref<1x16x2xf32, #tpu.memory_space<vmem>>, vector<1x16x2xf32>
    tpu.vector_store %arg5[%c0_9, %c0_10, %c0_11], %13 {strides = array<i32>} : memref<1x16x2xf32, #tpu.memory_space<vmem>>, vector<1x16x2xf32>,
    return
  }
  func.func @transform_0(%arg0: i32) -> (i32, i32) {
    %c0_i32 = arith.constant 0 : i32
    %c0_i32_0 = arith.constant 0 : i32
    return %c0_i32, %arg0 : i32, i32
  }
  func.func @transform_1(%arg0: i32) -> (i32, i32) {
    %c0_i32 = arith.constant 0 : i32
    %c0_i32_0 = arith.constant 0 : i32
    %c0_i32_1 = arith.constant 0 : i32
    return %c0_i32, %c0_i32_0 : i32, i32
  }
  func.func @transform_2(%arg0: i32) -> (i32, i32) {
    %c0_i32 = arith.constant 0 : i32
    %c0_i32_0 = arith.constant 0 : i32
    %c0_i32_1 = arith.constant 0 : i32
    return %c0_i32, %c0_i32_0 : i32, i32
  }
  func.func @transform_3(%arg0: i32) -> (i32, i32) {
    %c0_i32 = arith.constant 0 : i32
    %c0_i32_0 = arith.constant 0 : i32
    return %c0_i32, %arg0 : i32, i32
  }
  func.func @transform_4(%arg0: i32) -> (i32, i32, i32) {
    %c0_i32 = arith.constant 0 : i32
    %c0_i32_0 = arith.constant 0 : i32
    %c0_i32_1 = arith.constant 0 : i32
    return %arg0, %c0_i32, %c0_i32_0 : i32, i32, i32
  }
}

</mosaic_0001>

<llo_original>
// kernel: tpu_custom_call.1
$region0: #{tpu_custom_call.1}
  #allocation0 [shape = 'u32[]', space=smem, size = 0x4, offset = 0x4, fixed_abs, tag = 'smem constant byte address 0x4 - core index']
  #allocation1 [shape = 'u32[72,128]{1,0:T(1,128)}', space=vmem, size = 0x9000, scoped, tag = 'internal scratch']
  %s0 = inlined_call_operand.hbm [shape: f32[12,256], index: 0, kind: input, shape index: {}]
  %s1 = inlined_call_operand.vmem [shape: f32[16,12], index: 1, kind: input, shape index: {}]
  %s2 = inlined_call_operand.vmem [shape: f32[16,1], index: 2, kind: input, shape index: {}]
  %s3 = inlined_call_operand.hbm [shape: f32[16,256], index: 3, kind: output, shape index: {0}]
  %s4 = inlined_call_operand.vmem [shape: f32[2,16,2], index: 4, kind: output, shape index: {1}]
  %5 = xla_tuple %s3, %s4
  %s6 = sld [smem:[#allocation0]]
  $region57: #{tpu_custom_call.1} parent=0
    _
  %s8 = ssub.s32 1, %s6
  %s9 = scalar_select 0, %s8, %s6
  $region1: #{tpu_custom_call.1} parent=0
    #allocation2 [shape = 'u8[16384]{0}', space=vmem, size = 0x4000, scoped, tag = 'input window, operand 0']
    #allocation3 [shape = 's32[2]{0}', space=sflag, size = 0x8, scoped, tag = 'scoped memory for tpu_custom_call.1']
    #allocation4 [shape = 's32[2]{0}', space=sflag, size = 0x8, scoped, tag = 'scoped memory for tpu_custom_call.1']
    #allocation5 [shape = 'u8[16384]{0}', space=vmem, size = 0x4000, scoped, tag = 'output window, operand 0']
    %10 = vsyncpa [#allocation3], 0
    %s11 = scalar_lea.sflag [#allocation3], 1
    %12 = vsyncpa %s11, 0
    %13 = vsyncpa [#allocation4], 0
    %s14 = scalar_lea.sflag [#allocation4], 1
    %15 = vsyncpa %s14, 0
    loop: start=0, step=1, limit=4
    $region2: #{tpu_custom_call.1} parent=1 // loop_pre_header
      _
    $region3: #{tpu_custom_call.1} parent=1 // loop_header
      %s17 = sphi 0, %s21
      %p18 = scmp.ge.s32.totalorder %s17, 4
      %s27 = sphi 0, %s29
      %s30 = sphi 0, %s27
      %s31 = sphi 0, %s30
      %s47 = sphi 0, %s31
      %s51 = sphi 0, %s51
      %s53 = sphi 0, %s51
      %s54 = sphi 0, %s53
      %s68 = sphi 0, %s54
      %s72 = sphi 0, %s72
      %s74 = sphi 0, %s72
      %s75 = sphi 0, %s74
      %s89 = sphi 0, %s75
      %s95 = sphi 0, %s97
      %s98 = sphi 0, %s95
      %s99 = sphi 0, %s98
      %s115 = sphi 0, %s99
      %s121 = sphi 0, %s123
      %s124 = sphi 0, %s121
      %s125 = sphi 0, %s124
      %s141 = sphi 0, %s125
    $region4: #{tpu_custom_call.1} parent=1 // loop_header_branch
      %20 = sbr.rel (%p18) target = $region8
    $region5: #{tpu_custom_call.1} parent=1 // loop_body
      %s22 = ssub.s32 %s17, 1
      %s23 = ssub.s32 %s17, 2
      %s24 = sadd.s32 %s17, 1
      %s25 = ssub.s32 %s17, %s24
      %p26 = scmp.eq.s32.totalorder %s25, 0
      %s28 = sadd.s32 %s27, 1
      %s29 = scalar_select %p26, %s27, %s28
      %p32 = pneg %p26
      %p33 = scmp.eq.s32.totalorder %s17, 1
      %p34 = por %p32, %p33
      %p35 = scmp.ne.s32.totalorder %s27, %s30
      %p36 = scmp.eq.s32.totalorder %s17, 0
      %p37 = por %p35, %p36
      %p38 = scmp.ne.s32.totalorder %s27, %s30
      %p39 = scmp.eq.s32.totalorder %s22, 1
      %p40 = por %p38, %p39
      %p41 = scmp.ne.s32.totalorder %s30, %s31
      %p42 = scmp.eq.s32.totalorder %s22, 0
      %p43 = por %p41, %p42
      %p44 = scmp.ne.s32.totalorder %s30, %s31
      %p45 = scmp.eq.s32.totalorder %s23, 1
      %p46 = por %p44, %p45
      %p48 = scmp.ne.s32.totalorder %s31, %s47
      %p49 = scmp.eq.s32.totalorder %s23, 0
      %p50 = por %p48, %p49
      %s52 = sadd.s32 %s51, 1
      %p55 = scmp.eq.s32.totalorder %s17, 1
      %p56 = scmp.ne.s32.totalorder %s51, %s53
      %p57 = scmp.eq.s32.totalorder %s17, 0
      %p58 = por %p56, %p57
      %p59 = scmp.ne.s32.totalorder %s51, %s53
      %p60 = scmp.eq.s32.totalorder %s22, 1
      %p61 = por %p59, %p60
      %p62 = scmp.ne.s32.totalorder %s53, %s54
      %p63 = scmp.eq.s32.totalorder %s22, 0
      %p64 = por %p62, %p63
      %p65 = scmp.ne.s32.totalorder %s53, %s54
      %p66 = scmp.eq.s32.totalorder %s23, 1
      %p67 = por %p65, %p66
      %p69 = scmp.ne.s32.totalorder %s54, %s68
      %p70 = scmp.eq.s32.totalorder %s23, 0
      %p71 = por %p69, %p70
      %s73 = sadd.s32 %s72, 1
      %p76 = scmp.eq.s32.totalorder %s17, 1
      %p77 = scmp.ne.s32.totalorder %s72, %s74
      %p78 = scmp.eq.s32.totalorder %s17, 0
      %p79 = por %p77, %p78
      %p80 = scmp.ne.s32.totalorder %s72, %s74
      %p81 = scmp.eq.s32.totalorder %s22, 1
      %p82 = por %p80, %p81
      %p83 = scmp.ne.s32.totalorder %s74, %s75
      %p84 = scmp.eq.s32.totalorder %s22, 0
      %p85 = por %p83, %p84
      %p86 = scmp.ne.s32.totalorder %s74, %s75
      %p87 = scmp.eq.s32.totalorder %s23, 1
      %p88 = por %p86, %p87
      %p90 = scmp.ne.s32.totalorder %s75, %s89
      %p91 = scmp.eq.s32.totalorder %s23, 0
      %p92 = por %p90, %p91
      %s93 = ssub.s32 %s17, %s24
      %p94 = scmp.eq.s32.totalorder %s93, 0
      %s96 = sadd.s32 %s95, 1
      %s97 = scalar_select %p94, %s95, %s96
      %p100 = pneg %p94
      %p101 = scmp.eq.s32.totalorder %s17, 1
      %p102 = por %p100, %p101
      %p103 = scmp.ne.s32.totalorder %s95, %s98
      %p104 = scmp.eq.s32.totalorder %s17, 0
      %p105 = por %p103, %p104
      %p106 = scmp.ne.s32.totalorder %s95, %s98
      %p107 = scmp.eq.s32.totalorder %s22, 1
      %p108 = por %p106, %p107
      %p109 = scmp.ne.s32.totalorder %s98, %s99
      %p110 = scmp.eq.s32.totalorder %s22, 0
      %p111 = por %p109, %p110
      %p112 = scmp.ne.s32.totalorder %s98, %s99
      %p113 = scmp.eq.s32.totalorder %s23, 1
      %p114 = por %p112, %p113
      %p116 = scmp.ne.s32.totalorder %s99, %s115
      %p117 = scmp.eq.s32.totalorder %s23, 0
      %p118 = por %p116, %p117
      %s119 = ssub.s32 %s17, %s24
      %p120 = scmp.eq.s32.totalorder %s119, 0
      %s122 = sadd.s32 %s121, 1
      %s123 = scalar_select %p120, %s121, %s122
      %p126 = pneg %p120
      %p127 = scmp.eq.s32.totalorder %s17, 1
      %p128 = por %p126, %p127
      %p129 = scmp.ne.s32.totalorder %s121, %s124
      %p130 = scmp.eq.s32.totalorder %s17, 0
      %p131 = por %p129, %p130
      %p132 = scmp.ne.s32.totalorder %s121, %s124
      %p133 = scmp.eq.s32.totalorder %s22, 1
      %p134 = por %p132, %p133
      %p135 = scmp.ne.s32.totalorder %s124, %s125
      %p136 = scmp.eq.s32.totalorder %s22, 0
      %p137 = por %p135, %p136
      %p138 = scmp.ne.s32.totalorder %s124, %s125
      %p139 = scmp.eq.s32.totalorder %s23, 1
      %p140 = por %p138, %p139
      %p142 = scmp.ne.s32.totalorder %s125, %s141
      %p143 = scmp.eq.s32.totalorder %s23, 0
      %p144 = por %p142, %p143
      %p145 = scmp.le.s32.totalorder 1, %s17
      %p146 = scmp.lt.s32.totalorder %s17, 3
      %p147 = pnand %p145, %p146
      %p148 = pneg %p147
      // Predicated region
      $region9: #{tpu_custom_call.1} parent=5 // pred_check
        _
      $region10: #{tpu_custom_call.1} parent=5 // pred_check_branch
        %150 = sbr.rel (%p147) target = $region12
      $region11: #{tpu_custom_call.1} parent=5 // pred_region
        %s151 = ssub.s32 %s17, 1
        // Predicated region
        $region13: #{tpu_custom_call.1} parent=11 // pred_check
          %p152 = pneg %p64
        $region14: #{tpu_custom_call.1} parent=11 // pred_check_branch
          %154 = sbr.rel (%p152) target = $region16
        $region15: #{tpu_custom_call.1} parent=11 // pred_region
          _
        $region16: #{tpu_custom_call.1} parent=11 // pred_fallthru
          _
        // Predicated region
        $region17: #{tpu_custom_call.1} parent=11 // pred_check
          %p155 = pneg %p85
        $region18: #{tpu_custom_call.1} parent=11 // pred_check_branch
          %157 = sbr.rel (%p155) target = $region20
        $region19: #{tpu_custom_call.1} parent=11 // pred_region
          _
        $region20: #{tpu_custom_call.1} parent=11 // pred_fallthru
          _
      $region12: #{tpu_custom_call.1} parent=5 // pred_fallthru
        _
      %p158 = scmp.lt.s32.totalorder %s17, 2
      // Predicated region
      $region21: #{tpu_custom_call.1} parent=5 // pred_check
        %p159 = pneg %p158
      $region22: #{tpu_custom_call.1} parent=5 // pred_check_branch
        %161 = sbr.rel (%p159) target = $region24
      $region23: #{tpu_custom_call.1} parent=5 // pred_region
        // Predicated region
        $region25: #{tpu_custom_call.1} parent=23 // pred_check
          %p162 = pneg %p37
        $region26: #{tpu_custom_call.1} parent=23 // pred_check_branch
          %164 = sbr.rel (%p162) target = $region28
        $region27: #{tpu_custom_call.1} parent=23 // pred_region
          %s165 = sand.u32 %s27, 1
          %s166 = scalar_lea.sflag [#allocation3], %s165
          %s167 = sand.u32 %s27, 1
          %s168 = smul.addr %s167, 16
          %s169 = scalar_lea.vmem [#allocation2], %s168
          %171 = vsyncadd %s166, 0
          %s172 = smul.addr %s17, 8
          %s173 = scalar_lea.hbm %s0, %s172
          %s174 = sshll.u32 %s173, 4
          %s175 = int_to_ptr.hbm [resolvable:$true] %s174
          %s176 = sshll.u32 %s169, 4
          %s177 = int_to_ptr.vmem [resolvable:$true] %s176
          %182 = dma.hbm_to_vmem [thread:$0]  %s175, 256, %s177, %s166, 256, 128, 8
        $region28: #{tpu_custom_call.1} parent=23 // pred_fallthru
          _
      $region24: #{tpu_custom_call.1} parent=5 // pred_fallthru
        _
      %p183 = scmp.le.s32.totalorder 1, %s17
      %p184 = scmp.lt.s32.totalorder %s17, 3
      %p185 = pnand %p183, %p184
      %p186 = pneg %p185
      // Predicated region
      $region29: #{tpu_custom_call.1} parent=5 // pred_check
        _
      $region30: #{tpu_custom_call.1} parent=5 // pred_check_branch
        %188 = sbr.rel (%p185) target = $region32
      $region31: #{tpu_custom_call.1} parent=5 // pred_region
        %s189 = ssub.s32 %s17, 1
        %s190 = sand.u32 %s30, 1
        %s191 = scalar_lea.sflag [#allocation3], %s190
        %s192 = sand.u32 %s30, 1
        %s193 = smul.addr %s192, 16
        %s194 = scalar_lea.vmem [#allocation2], %s193
        // Predicated region
        $region33: #{tpu_custom_call.1} parent=31 // pred_check
          %p195 = pneg %p43
        $region34: #{tpu_custom_call.1} parent=31 // pred_check_branch
          %197 = sbr.rel (%p195) target = $region36
        $region35: #{tpu_custom_call.1} parent=31 // pred_region
          %199 = dma.done %s191, 256
        $region36: #{tpu_custom_call.1} parent=31 // pred_fallthru
          _
        %s200 = sand.u32 %s30, 1
        %s201 = scalar_lea.sflag [#allocation3], %s200
        %s202 = sand.u32 %s30, 1
        %s203 = smul.addr %s202, 16
        %s204 = scalar_lea.vmem [#allocation2], %s203
        %p205 = pneg %p43
        %p206 = pneg %p40
        %p207 = pneg %p64
        %p208 = pneg %p61
        %p209 = pneg %p85
        %p210 = pneg %p82
        %p211 = pneg %p111
        %p212 = pneg %p108
        %s213 = sand.u32 %s98, 1
        %s214 = scalar_lea.sflag [#allocation4], %s213
        %s215 = sand.u32 %s98, 1
        %s216 = smul.addr %s215, 16
        %s217 = scalar_lea.vmem [#allocation5], %s216
        %p218 = pneg %p137
        %p219 = pneg %p134
        %p220 = scmp.lt.s32.totalorder %s22, 1
        %s221 = scalar_select %p220, %s22, 1
        %s222 = smul.addr %s221, 2
        %s223 = smul.addr %s222, 8
        %s224 = scalar_lea.vmem %s4, %s223
        %p225 = scmp.lt.s32.totalorder %s22, 1
        %s226 = scalar_select %p225, %s22, 1
        %s227 = smul.addr %s226, 2
        %s228 = smul.addr %s227, 8
        %s229 = scalar_lea.vmem %s4, %s228
        %v230 = vld [vmem:[%s194] sm:$0xff]
        %v231 = vld [vmem:[%s194 + $0x8] sm:$0xf]
        %v232 = vld [vmem:[%s1] sm:$0xff]
        %v233 = vld [vmem:[%s1 + $0x8] sm:$0xff]
        %v234 = vld [vmem:[%s2] sm:$0xff]
        %v235 = vld [vmem:[%s2 + $0x8] sm:$0xff]
        %237 = vset.pattern.permute.xlu0 0
        %238 = vperm.xlu0 %237, %v234
        %v239 = vpop.permute.xlu0 %238
        %242 = vset.pattern.permute.xlu0 0
        %243 = vperm.xlu0 %242, %v235
        %v244 = vpop.permute.xlu0 %243
        %vm246 = vcmask 97280
        %v248 = vsel %vm246, %v232, 0
        %v251 = vsel %vm246, %v233, 0
        %vm253 = vcmask 1043456
        %v255 = vsel %vm253, %v231, 0
        %257 = vmatpush.msra.mxu0 0.0
        %258 = vmatpush.msra.mxu0 0.0
        %259 = vmatpush.msra.mxu0 0.0
        %260 = vmatpush.msra.mxu0 0.0
        %261 = vmatpush.msra.mxu0 0.0
        %262 = vmatpush.msra.mxu0 0.0
        %263 = vmatpush.msra.mxu0 0.0
        %264 = vmatpush.msra.mxu0 0.0
        %265 = vmatpush.msra.mxu0 0.0
        %266 = vmatpush.msra.mxu0 0.0
        %267 = vmatpush.msra.mxu0 0.0
        %268 = vmatpush.msra.mxu0 0.0
        %269 = vmatpush.msra.mxu0 0.0
        %270 = vmatpush.msra.mxu0 0.0
        %271 = vmatpush.msra.mxu0 %v255
        %272 = vmatpush.msra.mxu0 %v230
        %273 = vmatmul.f32.gmra.mxu0 %v248
        %v274 = vpop.f32.mrf.mxu0
        %v275 = vadd.f32 %v239, %v274
        %276 = vmatmul.f32.gmra.mxu0 %v251
        %v277 = vpop.f32.mrf.mxu0
        %v278 = vadd.f32 %v244, %v277
        %279 = vdwg.mxu0
        %280 = vst [vmem:[%s217] sm:$0xff] %v275
        %281 = vst [vmem:[%s217 + $0x8] sm:$0xff] %v278
        %282 = vadd.xlane.f32.xlu0 %v275
        %v283 = vpop.xlane.xlu0 %282
        %284 = vadd.xlane.f32.xlu0 %v278
        %v285 = vpop.xlane.xlu0 %284
        %v286 = vmul.f32 %v275, %v275
        %v287 = vmul.f32 %v278, %v278
        %288 = vadd.xlane.f32.xlu0 %v286
        %v289 = vpop.xlane.xlu0 %288
        %290 = vadd.xlane.f32.xlu0 %v287
        %v291 = vpop.xlane.xlu0 %290
        %vm292 = vcmask 7168
        %v293 = vsel %vm292, %v283, %v289
        %v294 = vsel %vm292, %v285, %v291
        %vm295 = vcmask 15360
        %296 = vst.msk [vmem:[%s229] sm:$0xff] %vm295, %v293
        %297 = vst.msk [vmem:[%s229 + $0x8] sm:$0xff] %vm295, %v294
        %s298 = sand.u32 %s98, 1
        %s299 = scalar_lea.sflag [#allocation4], %s298
        %s300 = sand.u32 %s98, 1
        %s301 = smul.addr %s300, 16
        %s302 = scalar_lea.vmem [#allocation5], %s301
        %p303 = scmp.lt.s32.totalorder %s22, 1
        %s304 = scalar_select %p303, %s22, 1
        %s305 = smul.addr %s304, 2
        %s306 = smul.addr %s305, 8
        %s307 = scalar_lea.vmem %s4, %s306
        // Predicated region
        $region37: #{tpu_custom_call.1} parent=31 // pred_check
          %p308 = pneg %p108
        $region38: #{tpu_custom_call.1} parent=31 // pred_check_branch
          %310 = sbr.rel (%p308) target = $region40
        $region39: #{tpu_custom_call.1} parent=31 // pred_region
          %312 = vsyncadd %s299, 0
          %s313 = smul.addr %s22, 8
          %s314 = scalar_lea.hbm %s3, %s313
          %s315 = sshll.u32 %s302, 4
          %s316 = int_to_ptr.vmem [resolvable:$true] %s315
          %s317 = sshll.u32 %s314, 4
          %s318 = int_to_ptr.hbm [resolvable:$true] %s317
          %323 = dma.vmem_to_hbm [thread:$0]  %s316, 256, %s318, %s299, 128, 256, 8
        $region40: #{tpu_custom_call.1} parent=31 // pred_fallthru
          _
        // Predicated region
        $region41: #{tpu_custom_call.1} parent=31 // pred_check
          %p324 = pneg %p134
        $region42: #{tpu_custom_call.1} parent=31 // pred_check_branch
          %326 = sbr.rel (%p324) target = $region44
        $region43: #{tpu_custom_call.1} parent=31 // pred_region
          _
        $region44: #{tpu_custom_call.1} parent=31 // pred_fallthru
          _
      $region32: #{tpu_custom_call.1} parent=5 // pred_fallthru
        _
      %p327 = scmp.le.s32.totalorder 2, %s17
      // Predicated region
      $region45: #{tpu_custom_call.1} parent=5 // pred_check
        %p328 = pneg %p327
      $region46: #{tpu_custom_call.1} parent=5 // pred_check_branch
        %330 = sbr.rel (%p328) target = $region48
      $region47: #{tpu_custom_call.1} parent=5 // pred_region
        %s331 = ssub.s32 %s17, 2
        // Predicated region
        $region49: #{tpu_custom_call.1} parent=47 // pred_check
          %p332 = pneg %p114
        $region50: #{tpu_custom_call.1} parent=47 // pred_check_branch
          %334 = sbr.rel (%p332) target = $region52
        $region51: #{tpu_custom_call.1} parent=47 // pred_region
          %s335 = sand.u32 %s99, 1
          %s336 = scalar_lea.sflag [#allocation4], %s335
          %s337 = sand.u32 %s99, 1
          %s338 = smul.addr %s337, 16
          %s339 = scalar_lea.vmem [#allocation5], %s338
          %341 = dma.done %s336, 256
        $region52: #{tpu_custom_call.1} parent=47 // pred_fallthru
          _
        // Predicated region
        $region53: #{tpu_custom_call.1} parent=47 // pred_check
          %p342 = pneg %p140
        $region54: #{tpu_custom_call.1} parent=47 // pred_check_branch
          %344 = sbr.rel (%p342) target = $region56
        $region55: #{tpu_custom_call.1} parent=47 // pred_region
          %p345 = scmp.lt.s32.totalorder %s23, 1
          %s346 = scalar_select %p345, %s23, 1
          %s347 = smul.addr %s346, 2
          %s348 = smul.addr %s347, 8
          %s349 = scalar_lea.vmem %s4, %s348
        $region56: #{tpu_custom_call.1} parent=47 // pred_fallthru
          _
      $region48: #{tpu_custom_call.1} parent=5 // pred_fallthru
        _
    $region6: #{tpu_custom_call.1} parent=1 // loop_footer
      %s21 = sadd.s32 1, %s17
    $region7: #{tpu_custom_call.1} parent=1 // loop_footer_branch
      %16 = sbr.rel target = $region3
    $region8: #{tpu_custom_call.1} parent=1 // loop_exit
      _
    %350 = vsyncpa [#allocation3], 1
    %s351 = scalar_lea.sflag [#allocation3], 1
    %352 = vsyncpa %s351, 1
    %353 = vsyncpa [#allocation4], 1
    %s354 = scalar_lea.sflag [#allocation4], 1
    %355 = vsyncpa %s354, 1

</llo_original>
